<compile_context>
chip_gen: v5e
topology: v5e:2x2
jax: 0.10.0
libtpu: 0.0.40
codegen_flags: <defaults>
</compile_context>

<pallas_src>
import functools

import jax
import jax.numpy as jnp
from jax.experimental import pallas as pl
from jax.experimental.pallas import tpu as pltpu


def _round_up(x, m):
    return ((x + m - 1) // m) * m


def _mlp_kernel(*refs, num_layers):
    """Fused MLP: every Linear(+ReLU) layer of the model in one kernel body.

    refs = (x_ref, w0_ref, b0_ref, ..., w{L-1}_ref, b{L-1}_ref, o_ref)
      x_ref : [TM, K0]      compute dtype (bf16 by default), zero-padded
      w_i   : [K_i, N_i]    compute dtype, zero-padded to (8,128) multiples
      b_i   : [1, N_i]      f32, zero-padded
      o_ref : [TM, N_last]  f32
    """
    x_ref = refs[0]
    o_ref = refs[-1]
    act = x_ref[...]                                    # streamed in compute dtype
    for i in range(num_layers):
        w_ref = refs[1 + 2 * i]
        b_ref = refs[2 + 2 * i]
        # MXU matmul with f32 accumulator.
        acc = jnp.dot(act, w_ref[...], preferred_element_type=jnp.float32)
        acc = acc + b_ref[...]                          # bias broadcast, f32 VPU
        if i < num_layers - 1:
            # ReLU, then carry the activation in the narrow compute dtype to
            # halve the live VMEM/vreg footprint between layers.
            act = jnp.maximum(acc, 0.0).astype(w_ref.dtype)
        else:
            o_ref[...] = acc.astype(o_ref.dtype)


def fused_mlp(x_padded, weights, biases):
    """Runs the whole (padded) MLP in one pallas_call.

    x_padded : [M_pad, K0_pad] compute dtype (bf16 by default).
    weights  : list of [K_pad, N_pad] compute-dtype arrays (zero-padded).
    biases   : list of [1, N_pad] f32 arrays (zero-padded).
    Returns  : [M_pad, N_last_pad] f32.
    """
    M_pad, K0 = x_padded.shape
    num_layers = len(weights)
    N_last = weights[-1].shape[1]

    # M tile: big enough to amortize the ~0.35us per-grid-step overhead (<=512
    # rows) and always >=2 grid steps once M_pad >= 32 so the "parallel" axis
    # can shard across v7x's two TensorCores.  M_pad is bucketed by the caller
    # (8, powers of two, multiples of 1024) so M_pad % TM == 0 always holds and
    # TM is either the full dim or a multiple of 16 (legal bf16 sublane tiling).
    if M_pad <= 16:
        TM = M_pad
    else:
        TM = min(512, M_pad // 2)
    assert M_pad % TM == 0

    in_specs = [pl.BlockSpec((TM, K0), lambda m: (m, 0))]
    args = [x_padded]
    flops = 0
    bytes_accessed = x_padded.size * x_padded.dtype.itemsize
    resident_bytes = 0
    for w, b in zip(weights, biases):
        # Weights / biases are constant across the M grid: resident blocks,
        # single-buffered (default double-buffering would waste 2x VMEM on
        # blocks that are fetched exactly once).
        in_specs.append(pl.BlockSpec(w.shape, lambda m: (0, 0),
                                     pipeline_mode=pl.Buffered(1)))
        in_specs.append(pl.BlockSpec(b.shape, lambda m: (0, 0),
                                     pipeline_mode=pl.Buffered(1)))
        args.append(w)
        args.append(b)
        flops += 2 * M_pad * w.shape[0] * w.shape[1]
        wb = w.size * w.dtype.itemsize + b.size * b.dtype.itemsize
        bytes_accessed += wb
        resident_bytes += wb
    bytes_accessed += M_pad * N_last * 4

    # VMEM budget: double-buffered input tile + double-buffered output tile +
    # resident weights/biases + slack for in-flight activations.  Capped at the
    # 64 MiB physical VMEM of v7x (v5e/v6e have 128 MiB).
    x_bytes = TM * K0 * x_padded.dtype.itemsize
    o_bytes = TM * N_last * 4
    vmem_need = 2 * x_bytes + 2 * o_bytes + resident_bytes + 4 * o_bytes
    vmem_limit = int(min(max(32 * 1024 * 1024, 2 * vmem_need),
                         64 * 1024 * 1024))

    kernel = functools.partial(_mlp_kernel, num_layers=num_layers)
    return pl.pallas_call(
        kernel,
        out_shape=jax.ShapeDtypeStruct((M_pad, N_last), jnp.float32),
        grid=(M_pad // TM,),
        in_specs=in_specs,
        out_specs=pl.BlockSpec((TM, N_last), lambda m: (m, 0)),
        compiler_params=pltpu.CompilerParams(
            dimension_semantics=("parallel",),
            vmem_limit_bytes=vmem_limit),
        cost_estimate=pl.CostEstimate(
            flops=flops, transcendentals=0, bytes_accessed=bytes_accessed),
    )(*args)


class FullyConnectedPallas:
    """JAX/Pallas port of the PyTorch FullyConnected module (inference mode)."""

    def __init__(self, num_classes, input_dim, hidden_dim, dropout=0.0,
                 compute_dtype=jnp.bfloat16, key=None):
        self.input_dim = input_dim
        self.output_dim = num_classes
        self.hidden_dim = tuple(hidden_dim)
        self.dropout = dropout
        self.compute_dtype = compute_dtype   # set jnp.float32 for strict torch parity
        # TODO(synk): training-time dropout (p>0) not implemented; p=0 / eval mode is identity.
        if key is None:
            key = jax.random.PRNGKey(0)

        dims = [input_dim] + list(hidden_dim) + [num_classes]
        pdims = [_round_up(d, 128) for d in dims]
        self._pdims = pdims

        self.params_ref = []   # unpadded f32 params (PyTorch-equivalent, for reference)
        self._weights = []     # padded compute-dtype [K_pad, N_pad] (layout: y = x @ W + b)
        self._biases = []      # padded f32 [1, N_pad]
        for li, (fan_in, fan_out) in enumerate(zip(dims[:-1], dims[1:])):
            key, kw, kb = jax.random.split(key, 3)
            bound = 1.0 / float(fan_in) ** 0.5
            w = jax.random.uniform(kw, (fan_in, fan_out), jnp.float32,
                                   minval=-bound, maxval=bound)
            bvec = jax.random.uniform(kb, (fan_out,), jnp.float32,
                                      minval=-bound, maxval=bound)
            self.params_ref.append((w, bvec))

            kp, npad = pdims[li], pdims[li + 1]
            w_p = jnp.zeros((kp, npad), jnp.float32).at[:fan_in, :fan_out].set(w)
            b_p = jnp.zeros((1, npad), jnp.float32).at[0, :fan_out].set(bvec)
            self._weights.append(w_p.astype(compute_dtype))
            self._biases.append(b_p)   # bias stays f32 (added to the f32 accumulator)

        # jit the WHOLE forward (reshape + pad + pallas_call + slice): for tiny
        # batches the kernel is launch/latency bound, so fusing the wrapper ops
        # under one compiled executable is the dominant lever.
        self._forward = jax.jit(self._forward_impl)

    @staticmethod
    def _bucket_m(batch):
        """Bucket padded batch sizes to a few values (limits recompiles and
        keeps M_pad divisible by the chosen M tile)."""
        m = max(batch, 8)
        if m <= 8:
            return 8
        if m <= 1024:
            return 1 << (m - 1).bit_length()      # next power of two
        return _round_up(m, 1024)

    def _forward_impl(self, x):
        # NCHW -> [B, input_dim], same as torch .view(-1, input_dim)
        x = x.reshape(-1, self.input_dim)
        B = x.shape[0]
        M_pad = self._bucket_m(B)
        K0_pad = self._pdims[0]
        x_p = jnp.pad(x.astype(self.compute_dtype),
                      ((0, M_pad - B), (0, K0_pad - self.input_dim)))
        out_p = fused_mlp(x_p, self._weights, self._biases)
        return out_p[:B, :self.output_dim]

    def __call__(self, x):
        return self._forward(jnp.asarray(x))


if __name__ == "__main__":
    key = jax.random.PRNGKey(0)
    k_x, k_p = jax.random.split(key)

    B, C, H, W = 2, 4, 16, 16            # input_dim = C*H*W = 1024
    input_dim = C * H * W
    hidden_dim = [128, 64]
    num_classes = 10

    x = jax.random.normal(k_x, (B, C, H, W), dtype=jnp.float32)

    model = FullyConnectedPallas(num_classes, input_dim, hidden_dim, key=k_p)
    out = jax.block_until_ready(model(x))
    assert out.shape == (B, num_classes), out.shape

    n_layers = len(model.params_ref)

    # Reference 1: identical mixed-precision math (bf16 streams, f32 accum).
    ref = x.reshape(-1, input_dim).astype(jnp.bfloat16)
    for i, (w, b) in enumerate(model.params_ref):
        y = jnp.dot(ref, w.astype(jnp.bfloat16),
                    preferred_element_type=jnp.float32) + b
        ref = jnp.maximum(y, 0.0).astype(jnp.bfloat16) if i < n_layers - 1 else y
    assert jnp.allclose(out, ref, atol=2e-3, rtol=2e-3), \
        float(jnp.max(jnp.abs(out - ref)))

    # Reference 2: full-f32 PyTorch semantics; loose tolerance for the bf16 path.
    ref32 = x.reshape(-1, input_dim)
    for i, (w, b) in enumerate(model.params_ref):
        y = ref32 @ w + b
        ref32 = jnp.maximum(y, 0.0) if i < n_layers - 1 else y
    assert jnp.allclose(out, ref32, atol=5e-2, rtol=5e-2), \
        float(jnp.max(jnp.abs(out - ref32)))

    print("KERNEL_OK")
</pallas_src>

<mosaic_0001>
module attributes {stable_mosaic.version = 11 : i64} {
  func.func @_mlp_kernel(%arg0: i32, %arg1: memref<8x1024xbf16, #tpu.memory_space<vmem>>, %arg2: memref<1024x128xbf16, #tpu.memory_space<vmem>>, %arg3: memref<1x128xf32, #tpu.memory_space<vmem>>, %arg4: memref<128x128xbf16, #tpu.memory_space<vmem>>, %arg5: memref<1x128xf32, #tpu.memory_space<vmem>>, %arg6: memref<128x128xbf16, #tpu.memory_space<vmem>>, %arg7: memref<1x128xf32, #tpu.memory_space<vmem>>, %arg8: memref<8x128xf32, #tpu.memory_space<vmem>>) attributes {dimension_semantics = [#tpu.dimension_semantics<parallel>], iteration_bounds = array<i64: 1>, scalar_prefetch = 0 : i64, scratch_operands = 0 : i64, tpu.core_type = #tpu.core_type<tc>, window_params = [{transform_indices = @transform_0, window_bounds = array<i64: 8, 1024>}, {pipeline_mode = #tpu.pipeline_mode<synchronous>, transform_indices = @transform_1, window_bounds = array<i64: 1024, 128>}, {pipeline_mode = #tpu.pipeline_mode<synchronous>, transform_indices = @transform_2, window_bounds = array<i64: 1, 128>}, {pipeline_mode = #tpu.pipeline_mode<synchronous>, transform_indices = @transform_3, window_bounds = array<i64: 128, 128>}, {pipeline_mode = #tpu.pipeline_mode<synchronous>, transform_indices = @transform_4, window_bounds = array<i64: 1, 128>}, {pipeline_mode = #tpu.pipeline_mode<synchronous>, transform_indices = @transform_5, window_bounds = array<i64: 128, 128>}, {pipeline_mode = #tpu.pipeline_mode<synchronous>, transform_indices = @transform_6, window_bounds = array<i64: 1, 128>}, {transform_indices = @transform_7, window_bounds = array<i64: 8, 128>}]} {
    %c0 = arith.constant 0 : index
    %c0_0 = arith.constant 0 : index
    %0 = vector.load %arg1[%c0, %c0_0] : memref<8x1024xbf16, #tpu.memory_space<vmem>>, vector<8x1024xbf16>
    %c0_1 = arith.constant 0 : index
    %c0_2 = arith.constant 0 : index
    %1 = vector.load %arg2[%c0_1, %c0_2] : memref<1024x128xbf16, #tpu.memory_space<vmem>>, vector<1024x128xbf16>
    %cst = arith.constant dense<0.000000e+00> : vector<8x128xf32>
    %2 = tpu.matmul %0, %1, %cst {dimension_numbers = #tpu.dot_dimension_numbers<[1], [0], [0], [1], [0, 0, 1, 1], [], []>} : vector<8x1024xbf16>, vector<1024x128xbf16>, vector<8x128xf32> -> vector<8x128xf32>
    %c0_3 = arith.constant 0 : index
    %c0_4 = arith.constant 0 : index
    %3 = vector.load %arg3[%c0_3, %c0_4] : memref<1x128xf32, #tpu.memory_space<vmem>>, vector<1x128xf32>
    %4 = vector.broadcast %3 : vector<1x128xf32> to vector<8x128xf32>
    %5 = arith.addf %2, %4 : vector<8x128xf32>
    %cst_5 = arith.constant 0.000000e+00 : f32
    %6 = vector.broadcast %cst_5 : f32 to vector<8x128xf32>
    %7 = arith.maximumf %5, %6 : vector<8x128xf32>
    %8 = arith.truncf %7 : vector<8x128xf32> to vector<8x128xbf16>
    %c0_6 = arith.constant 0 : index
    %c0_7 = arith.constant 0 : index
    %9 = vector.load %arg4[%c0_6, %c0_7] : memref<128x128xbf16, #tpu.memory_space<vmem>>, vector<128x128xbf16>
    %cst_8 = arith.constant dense<0.000000e+00> : vector<8x128xf32>
    %10 = tpu.matmul %8, %9, %cst_8 {dimension_numbers = #tpu.dot_dimension_numbers<[1], [0], [0], [1], [0, 0, 1, 1], [], []>} : vector<8x128xbf16>, vector<128x128xbf16>, vector<8x128xf32> -> vector<8x128xf32>
    %c0_9 = arith.constant 0 : index
    %c0_10 = arith.constant 0 : index
    %11 = vector.load %arg5[%c0_9, %c0_10] : memref<1x128xf32, #tpu.memory_space<vmem>>, vector<1x128xf32>
    %12 = vector.broadcast %11 : vector<1x128xf32> to vector<8x128xf32>
    %13 = arith.addf %10, %12 : vector<8x128xf32>
    %cst_11 = arith.constant 0.000000e+00 : f32
    %14 = vector.broadcast %cst_11 : f32 to vector<8x128xf32>
    %15 = arith.maximumf %13, %14 : vector<8x128xf32>
    %16 = arith.truncf %15 : vector<8x128xf32> to vector<8x128xbf16>
    %c0_12 = arith.constant 0 : index
    %c0_13 = arith.constant 0 : index
    %17 = vector.load %arg6[%c0_12, %c0_13] : memref<128x128xbf16, #tpu.memory_space<vmem>>, vector<128x128xbf16>
    %cst_14 = arith.constant dense<0.000000e+00> : vector<8x128xf32>
    %18 = tpu.matmul %16, %17, %cst_14 {dimension_numbers = #tpu.dot_dimension_numbers<[1], [0], [0], [1], [0, 0, 1, 1], [], []>} : vector<8x128xbf16>, vector<128x128xbf16>, vector<8x128xf32> -> vector<8x128xf32>
    %c0_15 = arith.constant 0 : index
    %c0_16 = arith.constant 0 : index
    %19 = vector.load %arg7[%c0_15, %c0_16] : memref<1x128xf32, #tpu.memory_space<vmem>>, vector<1x128xf32>
    %20 = vector.broadcast %19 : vector<1x128xf32> to vector<8x128xf32>
    %21 = arith.addf %18, %20 : vector<8x128xf32>
    %c0_17 = arith.constant 0 : index
    %c0_18 = arith.constant 0 : index
    %22 = vector.load %arg8[%c0_17, %c0_18] : memref<8x128xf32, #tpu.memory_space<vmem>>, vector<8x128xf32>
    tpu.vector_store %arg8[%c0_17, %c0_18], %21 {strides = array<i32>} : memref<8x128xf32, #tpu.memory_space<vmem>>, vector<8x128xf32>,
    return
  }
  func.func @transform_0(%arg0: i32) -> (i32, i32) {
    %c0_i32 = arith.constant 0 : i32
    %c0_i32_0 = arith.constant 0 : i32
    return %arg0, %c0_i32 : i32, i32
  }
  func.func @transform_1(%arg0: i32) -> (i32, i32) {
    %c0_i32 = arith.constant 0 : i32
    %c0_i32_0 = arith.constant 0 : i32
    %c0_i32_1 = arith.constant 0 : i32
    return %c0_i32, %c0_i32_0 : i32, i32
  }
  func.func @transform_2(%arg0: i32) -> (i32, i32) {
    %c0_i32 = arith.constant 0 : i32
    %c0_i32_0 = arith.constant 0 : i32
    %c0_i32_1 = arith.constant 0 : i32
    return %c0_i32, %c0_i32_0 : i32, i32
  }
  func.func @transform_3(%arg0: i32) -> (i32, i32) {
    %c0_i32 = arith.constant 0 : i32
    %c0_i32_0 = arith.constant 0 : i32
    %c0_i32_1 = arith.constant 0 : i32
    return %c0_i32, %c0_i32_0 : i32, i32
  }
  func.func @transform_4(%arg0: i32) -> (i32, i32) {
    %c0_i32 = arith.constant 0 : i32
    %c0_i32_0 = arith.constant 0 : i32
    %c0_i32_1 = arith.constant 0 : i32
    return %c0_i32, %c0_i32_0 : i32, i32
  }
  func.func @transform_5(%arg0: i32) -> (i32, i32) {
    %c0_i32 = arith.constant 0 : i32
    %c0_i32_0 = arith.constant 0 : i32
    %c0_i32_1 = arith.constant 0 : i32
    return %c0_i32, %c0_i32_0 : i32, i32
  }
  func.func @transform_6(%arg0: i32) -> (i32, i32) {
    %c0_i32 = arith.constant 0 : i32
    %c0_i32_0 = arith.constant 0 : i32
    %c0_i32_1 = arith.constant 0 : i32
    return %c0_i32, %c0_i32_0 : i32, i32
  }
  func.func @transform_7(%arg0: i32) -> (i32, i32) {
    %c0_i32 = arith.constant 0 : i32
    %c0_i32_0 = arith.constant 0 : i32
    return %arg0, %c0_i32 : i32, i32
  }
}

</mosaic_0001>

<llo_original>
// kernel: _forward_impl.1
$region0: #{_forward_impl.1}
  #allocation0 [shape = 'u32[]', space=smem, size = 0x4, offset = 0x4, fixed_abs, tag = 'smem constant byte address 0x4 - core index']
  #allocation1 [shape = 'u32[72,128]{1,0:T(1,128)}', space=vmem, size = 0x9000, scoped, tag = 'internal scratch']
  %s0 = inlined_call_operand.vmem [shape: bf16[8,1024], index: 0, kind: input, shape index: {}]
  %s1 = inlined_call_operand.hbm [shape: bf16[1024,128], index: 1, kind: input, shape index: {}]
  %s2 = inlined_call_operand.vmem [shape: f32[1,128], index: 2, kind: input, shape index: {}]
  %s3 = inlined_call_operand.vmem [shape: bf16[128,128], index: 3, kind: input, shape index: {}]
  %s4 = inlined_call_operand.vmem [shape: f32[1,128], index: 4, kind: input, shape index: {}]
  %s5 = inlined_call_operand.vmem [shape: bf16[128,128], index: 5, kind: input, shape index: {}]
  %s6 = inlined_call_operand.vmem [shape: f32[1,128], index: 6, kind: input, shape index: {}]
  %s7 = inlined_call_operand.vmem [shape: f32[8,128], index: 7, kind: output, shape index: {}]
  %s8 = sld [smem:[#allocation0]]
  $region42: #{_forward_impl.1} parent=0
    _
  %s10 = ssub.s32 1, %s8
  %s11 = scalar_select 0, %s10, %s8
  $region1: #{_forward_impl.1} parent=0
    #allocation2 [shape = 'u8[262144]{0}', space=vmem, size = 0x40000, scoped, tag = 'input window, operand 1, single buffered']
    #allocation3 [shape = 's32[1]{0}', space=sflag, size = 0x4, scoped, tag = 'scoped memory for _forward_impl.1']
    %12 = vsyncpa [#allocation3], 0
    // Predicated region
    $region2: #{_forward_impl.1} parent=1 // pred_check
      _
    $region3: #{_forward_impl.1} parent=1 // pred_check_branch
      %14 = sbr.rel (0) target = $region5
    $region4: #{_forward_impl.1} parent=1 // pred_region
      _
    $region5: #{_forward_impl.1} parent=1 // pred_fallthru
      _
    // Predicated region
    $region6: #{_forward_impl.1} parent=1 // pred_check
      _
    $region7: #{_forward_impl.1} parent=1 // pred_check_branch
      %16 = sbr.rel (0) target = $region9
    $region8: #{_forward_impl.1} parent=1 // pred_region
      %18 = vsyncadd [#allocation3], 0
      %s19 = sshll.u32 %s1, 4
      %s20 = int_to_ptr.hbm [resolvable:$true] %s19
      %s21 = sshll.u32 [#allocation2], 4
      %s22 = int_to_ptr.vmem [resolvable:$true] %s21
      %27 = dma.hbm_to_vmem [thread:$0]  %s20, 8192, %s22, [#allocation3], 64, 64, 4
    $region9: #{_forward_impl.1} parent=1 // pred_fallthru
      _
    // Predicated region
    $region10: #{_forward_impl.1} parent=1 // pred_check
      _
    $region11: #{_forward_impl.1} parent=1 // pred_check_branch
      %29 = sbr.rel (0) target = $region13
    $region12: #{_forward_impl.1} parent=1 // pred_region
      _
    $region13: #{_forward_impl.1} parent=1 // pred_fallthru
      _
    // Predicated region
    $region14: #{_forward_impl.1} parent=1 // pred_check
      _
    $region15: #{_forward_impl.1} parent=1 // pred_check_branch
      %31 = sbr.rel (0) target = $region17
    $region16: #{_forward_impl.1} parent=1 // pred_region
      _
    $region17: #{_forward_impl.1} parent=1 // pred_fallthru
      _
    // Predicated region
    $region18: #{_forward_impl.1} parent=1 // pred_check
      _
    $region19: #{_forward_impl.1} parent=1 // pred_check_branch
      %33 = sbr.rel (0) target = $region21
    $region20: #{_forward_impl.1} parent=1 // pred_region
      _
    $region21: #{_forward_impl.1} parent=1 // pred_fallthru
      _
    // Predicated region
    $region22: #{_forward_impl.1} parent=1 // pred_check
      _
    $region23: #{_forward_impl.1} parent=1 // pred_check_branch
      %35 = sbr.rel (0) target = $region25
    $region24: #{_forward_impl.1} parent=1 // pred_region
      _
    $region25: #{_forward_impl.1} parent=1 // pred_fallthru
      _
    // Predicated region
    $region26: #{_forward_impl.1} parent=1 // pred_check
      _
    $region27: #{_forward_impl.1} parent=1 // pred_check_branch
      %37 = sbr.rel (0) target = $region29
    $region28: #{_forward_impl.1} parent=1 // pred_region
      _
    $region29: #{_forward_impl.1} parent=1 // pred_fallthru
      _
    // Predicated region
    $region30: #{_forward_impl.1} parent=1 // pred_check
      _
    $region31: #{_forward_impl.1} parent=1 // pred_check_branch
      %39 = sbr.rel (0) target = $region33
    $region32: #{_forward_impl.1} parent=1 // pred_region
      %41 = dma.done [#allocation3], 8192
    $region33: #{_forward_impl.1} parent=1 // pred_fallthru
      _
    %v42 = vld [vmem:[%s0] sm:$0xff]
    %v43 = vld [vmem:[%s0 + $0x8] sm:$0xff]
    %v44 = vld [vmem:[%s0 + $0x10] sm:$0xff]
    %v45 = vld [vmem:[%s0 + $0x18] sm:$0xff]
    %v46 = vld [vmem:[#allocation2] sm:$0xf]
    %v47 = vld [vmem:[#allocation2 + $0x4] sm:$0xf]
    %v48 = vld [vmem:[#allocation2 + $0x8] sm:$0xf]
    %v49 = vld [vmem:[#allocation2 + $0xc] sm:$0xf]
    %v50 = vld [vmem:[#allocation2 + $0x10] sm:$0xf]
    %v51 = vld [vmem:[#allocation2 + $0x14] sm:$0xf]
    %v52 = vld [vmem:[#allocation2 + $0x18] sm:$0xf]
    %v53 = vld [vmem:[#allocation2 + $0x1c] sm:$0xf]
    %v54 = vld [vmem:[#allocation2 + $0x20] sm:$0xf]
    %v55 = vld [vmem:[#allocation2 + $0x24] sm:$0xf]
    %v56 = vld [vmem:[#allocation2 + $0x28] sm:$0xf]
    %v57 = vld [vmem:[#allocation2 + $0x2c] sm:$0xf]
    %v58 = vld [vmem:[#allocation2 + $0x30] sm:$0xf]
    %v59 = vld [vmem:[#allocation2 + $0x34] sm:$0xf]
    %v60 = vld [vmem:[#allocation2 + $0x38] sm:$0xf]
    %v61 = vld [vmem:[#allocation2 + $0x3c] sm:$0xf]
    %v62 = vld [vmem:[#allocation2 + $0x40] sm:$0xf]
    %v63 = vld [vmem:[#allocation2 + $0x44] sm:$0xf]
    %v64 = vld [vmem:[#allocation2 + $0x48] sm:$0xf]
    %v65 = vld [vmem:[#allocation2 + $0x4c] sm:$0xf]
    %v66 = vld [vmem:[#allocation2 + $0x50] sm:$0xf]
    %v67 = vld [vmem:[#allocation2 + $0x54] sm:$0xf]
    %v68 = vld [vmem:[#allocation2 + $0x58] sm:$0xf]
    %v69 = vld [vmem:[#allocation2 + $0x5c] sm:$0xf]
    %v70 = vld [vmem:[#allocation2 + $0x60] sm:$0xf]
    %v71 = vld [vmem:[#allocation2 + $0x64] sm:$0xf]
    %v72 = vld [vmem:[#allocation2 + $0x68] sm:$0xf]
    %v73 = vld [vmem:[#allocation2 + $0x6c] sm:$0xf]
    %v74 = vld [vmem:[#allocation2 + $0x70] sm:$0xf]
    %v75 = vld [vmem:[#allocation2 + $0x74] sm:$0xf]
    %v76 = vld [vmem:[#allocation2 + $0x78] sm:$0xf]
    %v77 = vld [vmem:[#allocation2 + $0x7c] sm:$0xf]
    %v78 = vld [vmem:[#allocation2 + $0x80] sm:$0xf]
    %v79 = vld [vmem:[#allocation2 + $0x84] sm:$0xf]
    %v80 = vld [vmem:[#allocation2 + $0x88] sm:$0xf]
    %v81 = vld [vmem:[#allocation2 + $0x8c] sm:$0xf]
    %v82 = vld [vmem:[#allocation2 + $0x90] sm:$0xf]
    %v83 = vld [vmem:[#allocation2 + $0x94] sm:$0xf]
    %v84 = vld [vmem:[#allocation2 + $0x98] sm:$0xf]
    %v85 = vld [vmem:[#allocation2 + $0x9c] sm:$0xf]
    %v86 = vld [vmem:[#allocation2 + $0xa0] sm:$0xf]
    %v87 = vld [vmem:[#allocation2 + $0xa4] sm:$0xf]
    %v88 = vld [vmem:[#allocation2 + $0xa8] sm:$0xf]
    %v89 = vld [vmem:[#allocation2 + $0xac] sm:$0xf]
    %v90 = vld [vmem:[#allocation2 + $0xb0] sm:$0xf]
    %v91 = vld [vmem:[#allocation2 + $0xb4] sm:$0xf]
    %v92 = vld [vmem:[#allocation2 + $0xb8] sm:$0xf]
    %v93 = vld [vmem:[#allocation2 + $0xbc] sm:$0xf]
    %v94 = vld [vmem:[#allocation2 + $0xc0] sm:$0xf]
    %v95 = vld [vmem:[#allocation2 + $0xc4] sm:$0xf]
    %v96 = vld [vmem:[#allocation2 + $0xc8] sm:$0xf]
    %v97 = vld [vmem:[#allocation2 + $0xcc] sm:$0xf]
    %v98 = vld [vmem:[#allocation2 + $0xd0] sm:$0xf]
    %v99 = vld [vmem:[#allocation2 + $0xd4] sm:$0xf]
    %v100 = vld [vmem:[#allocation2 + $0xd8] sm:$0xf]
    %v101 = vld [vmem:[#allocation2 + $0xdc] sm:$0xf]
    %v102 = vld [vmem:[#allocation2 + $0xe0] sm:$0xf]
    %v103 = vld [vmem:[#allocation2 + $0xe4] sm:$0xf]
    %v104 = vld [vmem:[#allocation2 + $0xe8] sm:$0xf]
    %v105 = vld [vmem:[#allocation2 + $0xec] sm:$0xf]
    %v106 = vld [vmem:[#allocation2 + $0xf0] sm:$0xf]
    %v107 = vld [vmem:[#allocation2 + $0xf4] sm:$0xf]
    %v108 = vld [vmem:[#allocation2 + $0xf8] sm:$0xf]
    %v109 = vld [vmem:[#allocation2 + $0xfc] sm:$0xf]
    %v110 = vld [vmem:[#allocation2 + $0x100] sm:$0xf]
    %v111 = vld [vmem:[#allocation2 + $0x104] sm:$0xf]
    %v112 = vld [vmem:[#allocation2 + $0x108] sm:$0xf]
    %v113 = vld [vmem:[#allocation2 + $0x10c] sm:$0xf]
    %v114 = vld [vmem:[#allocation2 + $0x110] sm:$0xf]
    %v115 = vld [vmem:[#allocation2 + $0x114] sm:$0xf]
    %v116 = vld [vmem:[#allocation2 + $0x118] sm:$0xf]
    %v117 = vld [vmem:[#allocation2 + $0x11c] sm:$0xf]
    %v118 = vld [vmem:[#allocation2 + $0x120] sm:$0xf]
    %v119 = vld [vmem:[#allocation2 + $0x124] sm:$0xf]
    %v120 = vld [vmem:[#allocation2 + $0x128] sm:$0xf]
    %v121 = vld [vmem:[#allocation2 + $0x12c] sm:$0xf]
    %v122 = vld [vmem:[#allocation2 + $0x130] sm:$0xf]
    %v123 = vld [vmem:[#allocation2 + $0x134] sm:$0xf]
    %v124 = vld [vmem:[#allocation2 + $0x138] sm:$0xf]
    %v125 = vld [vmem:[#allocation2 + $0x13c] sm:$0xf]
    %v126 = vld [vmem:[#allocation2 + $0x140] sm:$0xf]
    %v127 = vld [vmem:[#allocation2 + $0x144] sm:$0xf]
    %v128 = vld [vmem:[#allocation2 + $0x148] sm:$0xf]
    %v129 = vld [vmem:[#allocation2 + $0x14c] sm:$0xf]
    %v130 = vld [vmem:[#allocation2 + $0x150] sm:$0xf]
    %v131 = vld [vmem:[#allocation2 + $0x154] sm:$0xf]
    %v132 = vld [vmem:[#allocation2 + $0x158] sm:$0xf]
    %v133 = vld [vmem:[#allocation2 + $0x15c] sm:$0xf]
    %v134 = vld [vmem:[#allocation2 + $0x160] sm:$0xf]
    %v135 = vld [vmem:[#allocation2 + $0x164] sm:$0xf]
    %v136 = vld [vmem:[#allocation2 + $0x168] sm:$0xf]
    %v137 = vld [vmem:[#allocation2 + $0x16c] sm:$0xf]
    %v138 = vld [vmem:[#allocation2 + $0x170] sm:$0xf]
    %v139 = vld [vmem:[#allocation2 + $0x174] sm:$0xf]
    %v140 = vld [vmem:[#allocation2 + $0x178] sm:$0xf]
    %v141 = vld [vmem:[#allocation2 + $0x17c] sm:$0xf]
    %v142 = vld [vmem:[#allocation2 + $0x180] sm:$0xf]
    %v143 = vld [vmem:[#allocation2 + $0x184] sm:$0xf]
    %v144 = vld [vmem:[#allocation2 + $0x188] sm:$0xf]
    %v145 = vld [vmem:[#allocation2 + $0x18c] sm:$0xf]
    %v146 = vld [vmem:[#allocation2 + $0x190] sm:$0xf]
    %v147 = vld [vmem:[#allocation2 + $0x194] sm:$0xf]
    %v148 = vld [vmem:[#allocation2 + $0x198] sm:$0xf]
    %v149 = vld [vmem:[#allocation2 + $0x19c] sm:$0xf]
    %v150 = vld [vmem:[#allocation2 + $0x1a0] sm:$0xf]
    %v151 = vld [vmem:[#allocation2 + $0x1a4] sm:$0xf]
    %v152 = vld [vmem:[#allocation2 + $0x1a8] sm:$0xf]
    %v153 = vld [vmem:[#allocation2 + $0x1ac] sm:$0xf]
    %v154 = vld [vmem:[#allocation2 + $0x1b0] sm:$0xf]
    %v155 = vld [vmem:[#allocation2 + $0x1b4] sm:$0xf]
    %v156 = vld [vmem:[#allocation2 + $0x1b8] sm:$0xf]
    %v157 = vld [vmem:[#allocation2 + $0x1bc] sm:$0xf]
    %v158 = vld [vmem:[#allocation2 + $0x1c0] sm:$0xf]
    %v159 = vld [vmem:[#allocation2 + $0x1c4] sm:$0xf]
    %v160 = vld [vmem:[#allocation2 + $0x1c8] sm:$0xf]
    %v161 = vld [vmem:[#allocation2 + $0x1cc] sm:$0xf]
    %v162 = vld [vmem:[#allocation2 + $0x1d0] sm:$0xf]
    %v163 = vld [vmem:[#allocation2 + $0x1d4] sm:$0xf]
    %v164 = vld [vmem:[#allocation2 + $0x1d8] sm:$0xf]
    %v165 = vld [vmem:[#allocation2 + $0x1dc] sm:$0xf]
    %v166 = vld [vmem:[#allocation2 + $0x1e0] sm:$0xf]
    %v167 = vld [vmem:[#allocation2 + $0x1e4] sm:$0xf]
    %v168 = vld [vmem:[#allocation2 + $0x1e8] sm:$0xf]
    %v169 = vld [vmem:[#allocation2 + $0x1ec] sm:$0xf]
    %v170 = vld [vmem:[#allocation2 + $0x1f0] sm:$0xf]
    %v171 = vld [vmem:[#allocation2 + $0x1f4] sm:$0xf]
    %v172 = vld [vmem:[#allocation2 + $0x1f8] sm:$0xf]
    %v173 = vld [vmem:[#allocation2 + $0x1fc] sm:$0xf]
    %v174 = vld [vmem:[%s2] sm:$0x1]
    %v176 = vperm.slane %v174, 0
    %v182 = vunpack.c.l.b16 %v42
    %v183 = vunpack.c.h.b16 %v42
    %v184 = vunpack.c.l.b16 %v43
    %v185 = vunpack.c.h.b16 %v43
    %v186 = vunpack.c.l.b16 %v44
    %v187 = vunpack.c.h.b16 %v44
    %v188 = vunpack.c.l.b16 %v45
    %v189 = vunpack.c.h.b16 %v45
    %v190 = vpack.c.b16 %v182, %v182
    %v191 = vpack.c.b16 %v183, %v183
    %v192 = vpack.c.b16 %v184, %v184
    %v193 = vpack.c.b16 %v185, %v185
    %v194 = vpack.c.b16 %v186, %v186
    %v195 = vpack.c.b16 %v187, %v187
    %v196 = vpack.c.b16 %v188, %v188
    %v197 = vpack.c.b16 %v189, %v189
    %v334 = vunpack.c.l.b16 %v46
    %v335 = vunpack.c.l.b16 %v47
    %v336 = vunpack.c.l.b16 %v48
    %v337 = vunpack.c.l.b16 %v49
    %v338 = vunpack.c.l.b16 %v50
    %v339 = vunpack.c.l.b16 %v51
    %v340 = vunpack.c.l.b16 %v52
    %v341 = vunpack.c.l.b16 %v53
    %v342 = vunpack.c.l.b16 %v54
    %v343 = vunpack.c.l.b16 %v55
    %v344 = vunpack.c.l.b16 %v56
    %v345 = vunpack.c.l.b16 %v57
    %v346 = vunpack.c.l.b16 %v58
    %v347 = vunpack.c.l.b16 %v59
    %v348 = vunpack.c.l.b16 %v60
    %v349 = vunpack.c.l.b16 %v61
    %v350 = vunpack.c.l.b16 %v62
    %v351 = vunpack.c.l.b16 %v63
    %v352 = vunpack.c.l.b16 %v64
    %v353 = vunpack.c.l.b16 %v65
    %v354 = vunpack.c.l.b16 %v66
    %v355 = vunpack.c.l.b16 %v67
    %v356 = vunpack.c.l.b16 %v68
    %v357 = vunpack.c.l.b16 %v69
    %v358 = vunpack.c.l.b16 %v70
    %v359 = vunpack.c.l.b16 %v71
    %v360 = vunpack.c.l.b16 %v72
    %v361 = vunpack.c.l.b16 %v73
    %v362 = vunpack.c.l.b16 %v74
    %v363 = vunpack.c.l.b16 %v75
    %v364 = vunpack.c.l.b16 %v76
    %v365 = vunpack.c.l.b16 %v77
    %v366 = vunpack.c.l.b16 %v78
    %v367 = vunpack.c.l.b16 %v79
    %v368 = vunpack.c.l.b16 %v80
    %v369 = vunpack.c.l.b16 %v81
    %v370 = vunpack.c.l.b16 %v82
    %v371 = vunpack.c.l.b16 %v83
    %v372 = vunpack.c.l.b16 %v84
    %v373 = vunpack.c.l.b16 %v85
    %v374 = vunpack.c.l.b16 %v86
    %v375 = vunpack.c.l.b16 %v87
    %v376 = vunpack.c.l.b16 %v88
    %v377 = vunpack.c.l.b16 %v89
    %v378 = vunpack.c.l.b16 %v90
    %v379 = vunpack.c.l.b16 %v91
    %v380 = vunpack.c.l.b16 %v92
    %v381 = vunpack.c.l.b16 %v93
    %v382 = vunpack.c.l.b16 %v94
    %v383 = vunpack.c.l.b16 %v95
    %v384 = vunpack.c.l.b16 %v96
    %v385 = vunpack.c.l.b16 %v97
    %v386 = vunpack.c.l.b16 %v98
    %v387 = vunpack.c.l.b16 %v99
    %v388 = vunpack.c.l.b16 %v100
    %v389 = vunpack.c.l.b16 %v101
    %v390 = vunpack.c.l.b16 %v102
    %v391 = vunpack.c.l.b16 %v103
    %v392 = vunpack.c.l.b16 %v104
    %v393 = vunpack.c.l.b16 %v105
    %v394 = vunpack.c.l.b16 %v106
    %v395 = vunpack.c.l.b16 %v107
    %v396 = vunpack.c.l.b16 %v108
    %v397 = vunpack.c.l.b16 %v109
    %v398 = vunpack.c.l.b16 %v110
    %v399 = vunpack.c.l.b16 %v111
    %v400 = vunpack.c.l.b16 %v112
    %v401 = vunpack.c.l.b16 %v113
    %v402 = vunpack.c.l.b16 %v114
    %v403 = vunpack.c.l.b16 %v115
    %v404 = vunpack.c.l.b16 %v116
    %v405 = vunpack.c.l.b16 %v117
    %v406 = vunpack.c.l.b16 %v118
    %v407 = vunpack.c.l.b16 %v119
    %v408 = vunpack.c.l.b16 %v120
    %v409 = vunpack.c.l.b16 %v121
    %v410 = vunpack.c.l.b16 %v122
    %v411 = vunpack.c.l.b16 %v123
    %v412 = vunpack.c.l.b16 %v124
    %v413 = vunpack.c.l.b16 %v125
    %v414 = vunpack.c.l.b16 %v126
    %v415 = vunpack.c.l.b16 %v127
    %v416 = vunpack.c.l.b16 %v128
    %v417 = vunpack.c.l.b16 %v129
    %v418 = vunpack.c.l.b16 %v130
    %v419 = vunpack.c.l.b16 %v131
    %v420 = vunpack.c.l.b16 %v132
    %v421 = vunpack.c.l.b16 %v133
    %v422 = vunpack.c.l.b16 %v134
    %v423 = vunpack.c.l.b16 %v135
    %v424 = vunpack.c.l.b16 %v136
    %v425 = vunpack.c.l.b16 %v137
    %v426 = vunpack.c.l.b16 %v138
    %v427 = vunpack.c.l.b16 %v139
    %v428 = vunpack.c.l.b16 %v140
    %v429 = vunpack.c.l.b16 %v141
    %v430 = vunpack.c.l.b16 %v142
    %v431 = vunpack.c.l.b16 %v143
    %v432 = vunpack.c.l.b16 %v144
    %v433 = vunpack.c.l.b16 %v145
    %v434 = vunpack.c.l.b16 %v146
    %v435 = vunpack.c.l.b16 %v147
    %v436 = vunpack.c.l.b16 %v148
    %v437 = vunpack.c.l.b16 %v149
    %v438 = vunpack.c.l.b16 %v150
    %v439 = vunpack.c.l.b16 %v151
    %v440 = vunpack.c.l.b16 %v152
    %v441 = vunpack.c.l.b16 %v153
    %v442 = vunpack.c.l.b16 %v154
    %v443 = vunpack.c.l.b16 %v155
    %v444 = vunpack.c.l.b16 %v156
    %v445 = vunpack.c.l.b16 %v157
    %v446 = vunpack.c.l.b16 %v158
    %v447 = vunpack.c.l.b16 %v159
    %v448 = vunpack.c.l.b16 %v160
    %v449 = vunpack.c.l.b16 %v161
    %v450 = vunpack.c.l.b16 %v162
    %v451 = vunpack.c.l.b16 %v163
    %v452 = vunpack.c.l.b16 %v164
    %v453 = vunpack.c.l.b16 %v165
    %v454 = vunpack.c.l.b16 %v166
    %v455 = vunpack.c.l.b16 %v167
    %v456 = vunpack.c.l.b16 %v168
    %v457 = vunpack.c.l.b16 %v169
    %v458 = vunpack.c.l.b16 %v170
    %v459 = vunpack.c.l.b16 %v171
    %v460 = vunpack.c.l.b16 %v172
    %v461 = vunpack.c.l.b16 %v173
    %v462 = vpack.c.b16 %v335, %v334
    %v463 = vpack.c.b16 %v337, %v336
    %v464 = vpack.c.b16 %v339, %v338
    %v465 = vpack.c.b16 %v341, %v340
    %v466 = vpack.c.b16 %v343, %v342
    %v467 = vpack.c.b16 %v345, %v344
    %v468 = vpack.c.b16 %v347, %v346
    %v469 = vpack.c.b16 %v349, %v348
    %v470 = vpack.c.b16 %v351, %v350
    %v471 = vpack.c.b16 %v353, %v352
    %v472 = vpack.c.b16 %v355, %v354
    %v473 = vpack.c.b16 %v357, %v356
    %v474 = vpack.c.b16 %v359, %v358
    %v475 = vpack.c.b16 %v361, %v360
    %v476 = vpack.c.b16 %v363, %v362
    %v477 = vpack.c.b16 %v365, %v364
    %v478 = vpack.c.b16 %v367, %v366
    %v479 = vpack.c.b16 %v369, %v368
    %v480 = vpack.c.b16 %v371, %v370
    %v481 = vpack.c.b16 %v373, %v372
    %v482 = vpack.c.b16 %v375, %v374
    %v483 = vpack.c.b16 %v377, %v376
    %v484 = vpack.c.b16 %v379, %v378
    %v485 = vpack.c.b16 %v381, %v380
    %v486 = vpack.c.b16 %v383, %v382
    %v487 = vpack.c.b16 %v385, %v384
    %v488 = vpack.c.b16 %v387, %v386
    %v489 = vpack.c.b16 %v389, %v388
    %v490 = vpack.c.b16 %v391, %v390
    %v491 = vpack.c.b16 %v393, %v392
    %v492 = vpack.c.b16 %v395, %v394
    %v493 = vpack.c.b16 %v397, %v396
    %v494 = vpack.c.b16 %v399, %v398
    %v495 = vpack.c.b16 %v401, %v400
    %v496 = vpack.c.b16 %v403, %v402
    %v497 = vpack.c.b16 %v405, %v404
    %v498 = vpack.c.b16 %v407, %v406
    %v499 = vpack.c.b16 %v409, %v408
    %v500 = vpack.c.b16 %v411, %v410
    %v501 = vpack.c.b16 %v413, %v412
    %v502 = vpack.c.b16 %v415, %v414
    %v503 = vpack.c.b16 %v417, %v416
    %v504 = vpack.c.b16 %v419, %v418
    %v505 = vpack.c.b16 %v421, %v420
    %v506 = vpack.c.b16 %v423, %v422
    %v507 = vpack.c.b16 %v425, %v424
    %v508 = vpack.c.b16 %v427, %v426
    %v509 = vpack.c.b16 %v429, %v428
    %v510 = vpack.c.b16 %v431, %v430
    %v511 = vpack.c.b16 %v433, %v432
    %v512 = vpack.c.b16 %v435, %v434
    %v513 = vpack.c.b16 %v437, %v436
    %v514 = vpack.c.b16 %v439, %v438
    %v515 = vpack.c.b16 %v441, %v440
    %v516 = vpack.c.b16 %v443, %v442
    %v517 = vpack.c.b16 %v445, %v444
    %v518 = vpack.c.b16 %v447, %v446
    %v519 = vpack.c.b16 %v449, %v448
    %v520 = vpack.c.b16 %v451, %v450
    %v521 = vpack.c.b16 %v453, %v452
    %v522 = vpack.c.b16 %v455, %v454
    %v523 = vpack.c.b16 %v457, %v456
    %v524 = vpack.c.b16 %v459, %v458
    %v525 = vpack.c.b16 %v461, %v460
    %590 = vmatpush.bf16.msra.mxu0 %v469
    %591 = vmatpush.bf16.msra.mxu0 %v468
    %592 = vmatpush.bf16.msra.mxu0 %v467
    %593 = vmatpush.bf16.msra.mxu0 %v466
    %594 = vmatpush.bf16.msra.mxu0 %v465
    %595 = vmatpush.bf16.msra.mxu0 %v464
    %596 = vmatpush.bf16.msra.mxu0 %v463
    %597 = vmatpush.bf16.msra.mxu0 %v462
    %598 = vmatmul.bf16.gmra.mxu0 %v190
    %v599 = vpop.f32.mrf.mxu0
    %v600 = vadd.f32 %v176, %v599
    %v601 = vpop.f32.mrf.mxu0
    %602 = vdwg.mxu0
    %603 = vmatpush.bf16.msra.mxu0 %v477
    %604 = vmatpush.bf16.msra.mxu0 %v476
    %605 = vmatpush.bf16.msra.mxu0 %v475
    %606 = vmatpush.bf16.msra.mxu0 %v474
    %607 = vmatpush.bf16.msra.mxu0 %v473
    %608 = vmatpush.bf16.msra.mxu0 %v472
    %609 = vmatpush.bf16.msra.mxu0 %v471
    %610 = vmatpush.bf16.msra.mxu0 %v470
    %611 = vmatmul.bf16.gmra.mxu0 %v191
    %v612 = vpop.f32.mrf.mxu0
    %v613 = vadd.f32 %v600, %v612
    %v614 = vpop.f32.mrf.mxu0
    %615 = vdwg.mxu0
    %616 = vmatpush.bf16.msra.mxu0 %v485
    %617 = vmatpush.bf16.msra.mxu0 %v484
    %618 = vmatpush.bf16.msra.mxu0 %v483
    %619 = vmatpush.bf16.msra.mxu0 %v482
    %620 = vmatpush.bf16.msra.mxu0 %v481
    %621 = vmatpush.bf16.msra.mxu0 %v480
    %622 = vmatpush.bf16.msra.mxu0 %v479
    %623 = vmatpush.bf16.msra.mxu0 %v478
    %624 = vmatmul.bf16.gmra.mxu0 %v192
    %v625 = vpop.f32.mrf.mxu0
    %v626 = vadd.f32 %v613, %v625
    %v627 = vpop.f32.mrf.mxu0
    %628 = vdwg.mxu0
    %629 = vmatpush.bf16.msra.mxu0 %v493
    %630 = vmatpush.bf16.msra.mxu0 %v492
    %631 = vmatpush.bf16.msra.mxu0 %v491
    %632 = vmatpush.bf16.msra.mxu0 %v490
    %633 = vmatpush.bf16.msra.mxu0 %v489
    %634 = vmatpush.bf16.msra.mxu0 %v488
    %635 = vmatpush.bf16.msra.mxu0 %v487
    %636 = vmatpush.bf16.msra.mxu0 %v486
    %637 = vmatmul.bf16.gmra.mxu0 %v193
    %v638 = vpop.f32.mrf.mxu0
    %v639 = vadd.f32 %v626, %v638
    %v640 = vpop.f32.mrf.mxu0
    %641 = vdwg.mxu0
    %642 = vmatpush.bf16.msra.mxu0 %v501
    %643 = vmatpush.bf16.msra.mxu0 %v500
    %644 = vmatpush.bf16.msra.mxu0 %v499
    %645 = vmatpush.bf16.msra.mxu0 %v498
    %646 = vmatpush.bf16.msra.mxu0 %v497
    %647 = vmatpush.bf16.msra.mxu0 %v496
    %648 = vmatpush.bf16.msra.mxu0 %v495
    %649 = vmatpush.bf16.msra.mxu0 %v494
    %650 = vmatmul.bf16.gmra.mxu0 %v194
    %v651 = vpop.f32.mrf.mxu0
    %v652 = vadd.f32 %v639, %v651
    %v653 = vpop.f32.mrf.mxu0
    %654 = vdwg.mxu0
    %655 = vmatpush.bf16.msra.mxu0 %v509
    %656 = vmatpush.bf16.msra.mxu0 %v508
    %657 = vmatpush.bf16.msra.mxu0 %v507
    %658 = vmatpush.bf16.msra.mxu0 %v506
    %659 = vmatpush.bf16.msra.mxu0 %v505
    %660 = vmatpush.bf16.msra.mxu0 %v504
    %661 = vmatpush.bf16.msra.mxu0 %v503
    %662 = vmatpush.bf16.msra.mxu0 %v502
    %663 = vmatmul.bf16.gmra.mxu0 %v195
    %v664 = vpop.f32.mrf.mxu0
    %v665 = vadd.f32 %v652, %v664
    %v666 = vpop.f32.mrf.mxu0
    %667 = vdwg.mxu0
    %668 = vmatpush.bf16.msra.mxu0 %v517
    %669 = vmatpush.bf16.msra.mxu0 %v516
    %670 = vmatpush.bf16.msra.mxu0 %v515
    %671 = vmatpush.bf16.msra.mxu0 %v514
    %672 = vmatpush.bf16.msra.mxu0 %v513
    %673 = vmatpush.bf16.msra.mxu0 %v512
    %674 = vmatpush.bf16.msra.mxu0 %v511
    %675 = vmatpush.bf16.msra.mxu0 %v510
    %676 = vmatmul.bf16.gmra.mxu0 %v196
    %v677 = vpop.f32.mrf.mxu0
    %v678 = vadd.f32 %v665, %v677
    %v679 = vpop.f32.mrf.mxu0
    %680 = vdwg.mxu0
    %681 = vmatpush.bf16.msra.mxu0 %v525
    %682 = vmatpush.bf16.msra.mxu0 %v524
    %683 = vmatpush.bf16.msra.mxu0 %v523
    %684 = vmatpush.bf16.msra.mxu0 %v522
    %685 = vmatpush.bf16.msra.mxu0 %v521
    %686 = vmatpush.bf16.msra.mxu0 %v520
    %687 = vmatpush.bf16.msra.mxu0 %v519
    %688 = vmatpush.bf16.msra.mxu0 %v518
    %689 = vmatmul.bf16.gmra.mxu0 %v197
    %v690 = vpop.f32.mrf.mxu0
    %v691 = vadd.f32 %v678, %v690
    %v692 = vpop.f32.mrf.mxu0
    %693 = vdwg.mxu0
    %v694 = vmax.f32 %v691, 0.0
    %v695 = vpack.c.bf16 %v694, %v694
    %v696 = vld [vmem:[%s3] sm:$0xf]
    %v697 = vld [vmem:[%s3 + $0x4] sm:$0xf]
    %v698 = vld [vmem:[%s3 + $0x8] sm:$0xf]
    %v699 = vld [vmem:[%s3 + $0xc] sm:$0xf]
    %v700 = vld [vmem:[%s3 + $0x10] sm:$0xf]
    %v701 = vld [vmem:[%s3 + $0x14] sm:$0xf]
    %v702 = vld [vmem:[%s3 + $0x18] sm:$0xf]
    %v703 = vld [vmem:[%s3 + $0x1c] sm:$0xf]
    %v704 = vld [vmem:[%s3 + $0x20] sm:$0xf]
    %v705 = vld [vmem:[%s3 + $0x24] sm:$0xf]
    %v706 = vld [vmem:[%s3 + $0x28] sm:$0xf]
    %v707 = vld [vmem:[%s3 + $0x2c] sm:$0xf]
    %v708 = vld [vmem:[%s3 + $0x30] sm:$0xf]
    %v709 = vld [vmem:[%s3 + $0x34] sm:$0xf]
    %v710 = vld [vmem:[%s3 + $0x38] sm:$0xf]
    %v711 = vld [vmem:[%s3 + $0x3c] sm:$0xf]
    %v712 = vld [vmem:[%s4] sm:$0x1]
    %v714 = vperm.slane %v712, 0
    %v732 = vunpack.c.l.b16 %v696
    %v733 = vunpack.c.l.b16 %v697
    %v734 = vunpack.c.l.b16 %v698
    %v735 = vunpack.c.l.b16 %v699
    %v736 = vunpack.c.l.b16 %v700
    %v737 = vunpack.c.l.b16 %v701
    %v738 = vunpack.c.l.b16 %v702
    %v739 = vunpack.c.l.b16 %v703
    %v740 = vunpack.c.l.b16 %v704
    %v741 = vunpack.c.l.b16 %v705
    %v742 = vunpack.c.l.b16 %v706
    %v743 = vunpack.c.l.b16 %v707
    %v744 = vunpack.c.l.b16 %v708
    %v745 = vunpack.c.l.b16 %v709
    %v746 = vunpack.c.l.b16 %v710
    %v747 = vunpack.c.l.b16 %v711
    %v748 = vpack.c.b16 %v733, %v732
    %v749 = vpack.c.b16 %v735, %v734
    %v750 = vpack.c.b16 %v737, %v736
    %v751 = vpack.c.b16 %v739, %v738
    %v752 = vpack.c.b16 %v741, %v740
    %v753 = vpack.c.b16 %v743, %v742
    %v754 = vpack.c.b16 %v745, %v744
    %v755 = vpack.c.b16 %v747, %v746
    %764 = vmatpush.bf16.msra.mxu0 %v755
    %765 = vmatpush.bf16.msra.mxu0 %v754
    %766 = vmatpush.bf16.msra.mxu0 %v753
    %767 = vmatpush.bf16.msra.mxu0 %v752
    %768 = vmatpush.bf16.msra.mxu0 %v751
    %769 = vmatpush.bf16.msra.mxu0 %v750
    %770 = vmatpush.bf16.msra.mxu0 %v749
    %771 = vmatpush.bf16.msra.mxu0 %v748
    %772 = vmatmul.bf16.gmra.mxu0 %v695
    %v773 = vpop.f32.mrf.mxu0
    %v774 = vadd.f32 %v714, %v773
    %v775 = vpop.f32.mrf.mxu0
    %776 = vdwg.mxu0
    %v777 = vmax.f32 %v774, 0.0
    %v778 = vpack.c.bf16 %v777, %v777
    %v779 = vld [vmem:[%s5] sm:$0xf]
    %v780 = vld [vmem:[%s5 + $0x4] sm:$0xf]
    %v781 = vld [vmem:[%s5 + $0x8] sm:$0xf]
    %v782 = vld [vmem:[%s5 + $0xc] sm:$0xf]
    %v783 = vld [vmem:[%s5 + $0x10] sm:$0xf]
    %v784 = vld [vmem:[%s5 + $0x14] sm:$0xf]
    %v785 = vld [vmem:[%s5 + $0x18] sm:$0xf]
    %v786 = vld [vmem:[%s5 + $0x1c] sm:$0xf]
    %v787 = vld [vmem:[%s5 + $0x20] sm:$0xf]
    %v788 = vld [vmem:[%s5 + $0x24] sm:$0xf]
    %v789 = vld [vmem:[%s5 + $0x28] sm:$0xf]
    %v790 = vld [vmem:[%s5 + $0x2c] sm:$0xf]
    %v791 = vld [vmem:[%s5 + $0x30] sm:$0xf]
    %v792 = vld [vmem:[%s5 + $0x34] sm:$0xf]
    %v793 = vld [vmem:[%s5 + $0x38] sm:$0xf]
    %v794 = vld [vmem:[%s5 + $0x3c] sm:$0xf]
    %v795 = vld [vmem:[%s6] sm:$0x1]
    %v797 = vperm.slane %v795, 0
    %v815 = vunpack.c.l.b16 %v779
    %v816 = vunpack.c.l.b16 %v780
    %v817 = vunpack.c.l.b16 %v781
    %v818 = vunpack.c.l.b16 %v782
    %v819 = vunpack.c.l.b16 %v783
    %v820 = vunpack.c.l.b16 %v784
    %v821 = vunpack.c.l.b16 %v785
    %v822 = vunpack.c.l.b16 %v786
    %v823 = vunpack.c.l.b16 %v787
    %v824 = vunpack.c.l.b16 %v788
    %v825 = vunpack.c.l.b16 %v789
    %v826 = vunpack.c.l.b16 %v790
    %v827 = vunpack.c.l.b16 %v791
    %v828 = vunpack.c.l.b16 %v792
    %v829 = vunpack.c.l.b16 %v793
    %v830 = vunpack.c.l.b16 %v794
    %v831 = vpack.c.b16 %v816, %v815
    %v832 = vpack.c.b16 %v818, %v817
    %v833 = vpack.c.b16 %v820, %v819
    %v834 = vpack.c.b16 %v822, %v821
    %v835 = vpack.c.b16 %v824, %v823
    %v836 = vpack.c.b16 %v826, %v825
    %v837 = vpack.c.b16 %v828, %v827
    %v838 = vpack.c.b16 %v830, %v829
    %847 = vmatpush.bf16.msra.mxu0 %v838
    %848 = vmatpush.bf16.msra.mxu0 %v837
    %849 = vmatpush.bf16.msra.mxu0 %v836
    %850 = vmatpush.bf16.msra.mxu0 %v835
    %851 = vmatpush.bf16.msra.mxu0 %v834
    %852 = vmatpush.bf16.msra.mxu0 %v833
    %853 = vmatpush.bf16.msra.mxu0 %v832
    %854 = vmatpush.bf16.msra.mxu0 %v831
    %855 = vmatmul.bf16.gmra.mxu0 %v778
    %v856 = vpop.f32.mrf.mxu0
    %v857 = vadd.f32 %v797, %v856
    %v858 = vpop.f32.mrf.mxu0
    %859 = vdwg.mxu0
    %860 = vst [vmem:[%s7] sm:$0xff] %v857
    // Predicated region
    $region34: #{_forward_impl.1} parent=1 // pred_check
      _
    $region35: #{_forward_impl.1} parent=1 // pred_check_branch
      %862 = sbr.rel (0) target = $region37
    $region36: #{_forward_impl.1} parent=1 // pred_region
      _
    $region37: #{_forward_impl.1} parent=1 // pred_fallthru
      _
    // Predicated region
    $region38: #{_forward_impl.1} parent=1 // pred_check
      _
    $region39: #{_forward_impl.1} parent=1 // pred_check_branch
      %864 = sbr.rel (0) target = $region41
    $region40: #{_forward_impl.1} parent=1 // pred_region
      _
    $region41: #{_forward_impl.1} parent=1 // pred_fallthru
      _
    %865 = vsyncpa [#allocation3], 1

</llo_original>
